<compile_context>
chip_gen: v5e
topology: v5e:2x2
jax: 0.10.0
libtpu: 0.0.40
codegen_flags: <defaults>
</compile_context>

<pallas_src>
import functools

import jax
import jax.numpy as jnp
from jax.experimental import pallas as pl
from jax.experimental.pallas import tpu as pltpu


def _round_up(x, m):
    return (x + m - 1) // m * m


def _concat_bottleneck_kernel(x_ref, w_ref, o_ref, patch_ref, *,
                              width, cin, cin_pad):
    """One batch element: conv3x3(pad=1) + InstanceNorm(affine=False) + ReLU.

    x_ref:     (Cin, H*W)         image, channels on sublanes, flat spatial on lanes
    w_ref:     (Cout, 9*Cin_pad)  packed conv weights, tap-major then (zero-padded) channel
    o_ref:     (Cout, H*W)        output image
    patch_ref: (9*Cin_pad, H*W)   VMEM scratch holding the im2col matrix
    """
    hw = x_ref.shape[-1]

    # Zero the im2col scratch: the shifted stores below only cover in-bounds
    # destination lanes and the real (un-padded) channel rows; everything else
    # must stay zero (the conv's zero pad / dead K rows).
    patch_ref[...] = jnp.zeros(patch_ref.shape, patch_ref.dtype)

    x = x_ref[...]

    # Source-column masks implementing the horizontal zero padding.  A tap with
    # offset (dy, dx) scatters source pixel (ys, xs) to destination
    # (ys - dy, xs - dx); it is only valid while xs - dx stays inside [0, W).
    col = jax.lax.broadcasted_iota(jnp.int32, x.shape, 1) % width
    zeros = jnp.zeros_like(x)
    x_dx_p1 = jnp.where(col >= 1, x, zeros)           # used by dx = +1 taps
    x_dx_m1 = jnp.where(col <= width - 2, x, zeros)   # used by dx = -1 taps

    tap = 0
    for dy in (-1, 0, 1):
        for dx in (-1, 0, 1):
            if dx == 1:
                src = x_dx_p1
            elif dx == -1:
                src = x_dx_m1
            else:
                src = x
            s = dy * width + dx          # flat source offset of this tap
            dst_lo = max(0, -s)
            src_lo = max(0, s)
            span = hw - abs(s)
            row0 = tap * cin_pad         # sublane-tile-aligned block start
            # patch[tap, ci, p] = x[ci, p + s] (0 outside) -> lane-shifted store.
            patch_ref[row0:row0 + cin, dst_lo:dst_lo + span] = (
                src[:, src_lo:src_lo + span])
            tap += 1

    # Single MXU matmul with K = 9*Cin_pad: (Cout, K) @ (K, H*W) -> f32.
    acc = jnp.dot(w_ref[...], patch_ref[...],
                  preferred_element_type=jnp.float32)

    # InstanceNorm2d (affine=False): per-(sample, channel) stats over spatial
    # dims, biased variance, eps=1e-5.  The conv bias (a per-channel constant)
    # is cancelled exactly by the mean subtraction, so it is never added.
    mean = jnp.mean(acc, axis=1, keepdims=True)
    centered = acc - mean
    var = jnp.mean(centered * centered, axis=1, keepdims=True)
    y = centered * jax.lax.rsqrt(var + 1e-5)

    # ReLU, cast back; lane-dense (H*W-wide) store.
    o_ref[...] = jnp.maximum(y, 0.0).astype(o_ref.dtype)


@jax.jit
def concat_bottleneck_forward(dec, weight, bias=None):
    """dec: (N, Cin, H, W); weight: (Cout, Cin, 3, 3); bias: (Cout,).

    `bias` is accepted for API parity but unused: InstanceNorm2d(affine=False)
    cancels a per-channel constant exactly, so adding it would be dead work.
    """
    del bias
    N, Cin, H, W = dec.shape
    Cout = weight.shape[0]
    HW = H * W
    # Pad each tap's channel block to a sublane multiple so every scratch store
    # starts on an (8, 128) tile boundary.  Free on the MXU (K <= 128 anyway).
    Cin_pad = _round_up(Cin, 8)

    # Free, layout-preserving view: no transposes, no padding of x in HBM.
    x = dec.reshape(N, Cin, HW)

    # (Cout, Cin, 3, 3) -> (Cout, 3, 3, Cin) -> zero-pad Cin -> (Cout, 9*Cin_pad):
    # one lane-dense weight slab, tap-major to match the kernel's im2col rows.
    w_t = jnp.transpose(weight, (0, 2, 3, 1))
    if Cin_pad != Cin:
        w_t = jnp.pad(w_t, ((0, 0), (0, 0), (0, 0), (0, Cin_pad - Cin)))
    w_packed = w_t.reshape(Cout, 9 * Cin_pad)

    kernel = functools.partial(_concat_bottleneck_kernel,
                               width=W, cin=Cin, cin_pad=Cin_pad)

    # TODO(synk): for large images that do not fit VMEM (esp. v7x's 64 MiB),
    # add a spatial grid axis and turn the InstanceNorm into a running
    # sum / sum-of-squares reduction finalized on the last spatial tile.
    out_flat = pl.pallas_call(
        kernel,
        out_shape=jax.ShapeDtypeStruct((N, Cout, HW), dec.dtype),
        grid_spec=pltpu.PrefetchScalarGridSpec(
            num_scalar_prefetch=0,
            grid=(N,),
            in_specs=[
                pl.BlockSpec((None, Cin, HW), lambda n: (n, 0, 0)),
                pl.BlockSpec((Cout, 9 * Cin_pad), lambda n: (0, 0)),
            ],
            out_specs=pl.BlockSpec((None, Cout, HW), lambda n: (n, 0, 0)),
            scratch_shapes=[pltpu.VMEM((9 * Cin_pad, HW), dec.dtype)],
        ),
        compiler_params=pltpu.CompilerParams(
            dimension_semantics=("parallel",),
            vmem_limit_bytes=32 * 1024 * 1024,
        ),
    )(x, w_packed)

    return out_flat.reshape(N, Cout, H, W)


def _reference(dec, weight, bias):
    """Pure-JAX reference: Conv2d(3x3, pad=1, bias) + InstanceNorm2d + ReLU."""
    out = jax.lax.conv_general_dilated(
        dec, weight, window_strides=(1, 1), padding=((1, 1), (1, 1)),
        dimension_numbers=("NCHW", "OIHW", "NCHW"),
        precision=jax.lax.Precision.HIGHEST)
    out = out + bias[None, :, None, None]
    mean = jnp.mean(out, axis=(2, 3), keepdims=True)
    var = jnp.mean((out - mean) ** 2, axis=(2, 3), keepdims=True)
    out = (out - mean) * jax.lax.rsqrt(var + 1e-5)
    return jnp.maximum(out, 0.0)


if __name__ == "__main__":
    # Small, deterministic example: batch=2, in_channels=4, out_channels=8, 16x16.
    N, Cin, Cout, H, W = 2, 4, 8, 16, 16

    key = jax.random.PRNGKey(0)
    kx, kw, kb = jax.random.split(key, 3)

    dec = jax.random.normal(kx, (N, Cin, H, W), dtype=jnp.float32)
    fan_in = Cin * 3 * 3
    weight = jax.random.normal(kw, (Cout, Cin, 3, 3), dtype=jnp.float32) / jnp.sqrt(fan_in)
    bias = jax.random.normal(kb, (Cout,), dtype=jnp.float32) * 0.01

    out = concat_bottleneck_forward(dec, weight, bias)
    jax.block_until_ready(out)
    assert out.shape == (N, Cout, H, W), out.shape

    # Numerical check against a plain-XLA reference (reference includes the
    # conv bias, demonstrating that InstanceNorm centering cancels it).
    ref = _reference(dec, weight, bias)
    max_err = float(jnp.max(jnp.abs(out - ref)))
    assert max_err < 1e-3, f"max abs error {max_err}"

    print("KERNEL_OK")
</pallas_src>

<mosaic_0001>
module attributes {stable_mosaic.version = 11 : i64} {
  func.func @_concat_bottleneck_kernel(%arg0: i32, %arg1: memref<1x4x256xf32, #tpu.memory_space<vmem>>, %arg2: memref<8x72xf32, #tpu.memory_space<vmem>>, %arg3: memref<1x8x256xf32, #tpu.memory_space<vmem>>, %arg4: memref<72x256xf32, #tpu.memory_space<vmem>>) attributes {dimension_semantics = [#tpu.dimension_semantics<parallel>], iteration_bounds = array<i64: 2>, scalar_prefetch = 0 : i64, scratch_operands = 1 : i64, tpu.core_type = #tpu.core_type<tc>, window_params = [{transform_indices = @transform_0, window_bounds = array<i64: 1, 4, 256>}, {pipeline_mode = #tpu.pipeline_mode<synchronous>, transform_indices = @transform_1, window_bounds = array<i64: 8, 72>}, {transform_indices = @transform_2, window_bounds = array<i64: 1, 8, 256>}]} {
    %cst = arith.constant 0.000000e+00 : f32
    %0 = vector.broadcast %cst : f32 to vector<72x256xf32>
    %c0 = arith.constant 0 : index
    %c0_0 = arith.constant 0 : index
    %1 = vector.load %arg4[%c0, %c0_0] : memref<72x256xf32, #tpu.memory_space<vmem>>, vector<72x256xf32>
    tpu.vector_store %arg4[%c0, %c0_0], %0 {strides = array<i32>} : memref<72x256xf32, #tpu.memory_space<vmem>>, vector<72x256xf32>,
    %c0_1 = arith.constant 0 : index
    %c0_2 = arith.constant 0 : index
    %c0_3 = arith.constant 0 : index
    %2 = vector.load %arg1[%c0_1, %c0_2, %c0_3] : memref<1x4x256xf32, #tpu.memory_space<vmem>>, vector<1x4x256xf32>
    %3 = vector.shape_cast %2 : vector<1x4x256xf32> to vector<4x256xf32>
    %4 = tpu.iota {dimensions = array<i32: 1>} : vector<4x256xi32>
    %c16_i32 = arith.constant 16 : i32
    %c0_i32 = arith.constant 0 : i32
    %5 = arith.cmpi eq, %c16_i32, %c0_i32 : i32
    %c1_i32 = arith.constant 1 : i32
    %6 = arith.select %5, %c1_i32, %c16_i32 : i32
    %7 = vector.broadcast %6 : i32 to vector<4x256xi32>
    %8 = arith.remsi %4, %7 : vector<4x256xi32>
    %c0_i32_4 = arith.constant 0 : i32
    %9 = vector.broadcast %c0_i32_4 : i32 to vector<4x256xi32>
    %10 = arith.cmpi ne, %8, %9 : vector<4x256xi32>
    %c0_i32_5 = arith.constant 0 : i32
    %11 = vector.broadcast %c0_i32_5 : i32 to vector<4x256xi32>
    %12 = arith.cmpi slt, %8, %11 : vector<4x256xi32>
    %c0_i32_6 = arith.constant 0 : i32
    %13 = arith.cmpi slt, %6, %c0_i32_6 : i32
    %14 = vector.broadcast %13 : i1 to vector<4x256xi1>
    %15 = vector.broadcast %14 : vector<4x256xi1> to vector<4x256xi1>
    %16 = arith.xori %12, %15 : vector<4x256xi1>
    %17 = arith.andi %16, %10 : vector<4x256xi1>
    %18 = vector.broadcast %6 : i32 to vector<4x256xi32>
    %19 = arith.addi %8, %18 : vector<4x256xi32>
    %20 = arith.select %17, %19, %8 : vector<4x256xi1>, vector<4x256xi32>
    %cst_7 = arith.constant 0.000000e+00 : f32
    %21 = vector.broadcast %cst_7 : f32 to vector<4x256xf32>
    %c1_i32_8 = arith.constant 1 : i32
    %22 = vector.broadcast %c1_i32_8 : i32 to vector<4x256xi32>
    %23 = arith.cmpi sge, %20, %22 : vector<4x256xi32>
    %24 = arith.select %23, %3, %21 : vector<4x256xi1>, vector<4x256xf32>
    %c14_i32 = arith.constant 14 : i32
    %25 = vector.broadcast %c14_i32 : i32 to vector<4x256xi32>
    %26 = arith.cmpi sle, %20, %25 : vector<4x256xi32>
    %27 = arith.select %26, %3, %21 : vector<4x256xi1>, vector<4x256xf32>
    %28 = vector.extract_strided_slice %27 {offsets = [0, 0], sizes = [4, 239], strides = [1, 1]} : vector<4x256xf32> to vector<4x239xf32>
    %c0_9 = arith.constant 0 : index
    %c17 = arith.constant 17 : index
    %29 = vector.load %arg4[%c0_9, %c17] : memref<72x256xf32, #tpu.memory_space<vmem>>, vector<4x239xf32>
    tpu.vector_store %arg4[%c0_9, %c17], %28 {strides = array<i32>} : memref<72x256xf32, #tpu.memory_space<vmem>>, vector<4x239xf32>,
    %30 = vector.extract_strided_slice %3 {offsets = [0, 0], sizes = [4, 240], strides = [1, 1]} : vector<4x256xf32> to vector<4x240xf32>
    %c8 = arith.constant 8 : index
    %c16 = arith.constant 16 : index
    %31 = vector.load %arg4[%c8, %c16] : memref<72x256xf32, #tpu.memory_space<vmem>>, vector<4x240xf32>
    tpu.vector_store %arg4[%c8, %c16], %30 {strides = array<i32>} : memref<72x256xf32, #tpu.memory_space<vmem>>, vector<4x240xf32>,
    %32 = vector.extract_strided_slice %24 {offsets = [0, 0], sizes = [4, 241], strides = [1, 1]} : vector<4x256xf32> to vector<4x241xf32>
    %c16_10 = arith.constant 16 : index
    %c15 = arith.constant 15 : index
    %33 = vector.load %arg4[%c16_10, %c15] : memref<72x256xf32, #tpu.memory_space<vmem>>, vector<4x241xf32>
    tpu.vector_store %arg4[%c16_10, %c15], %32 {strides = array<i32>} : memref<72x256xf32, #tpu.memory_space<vmem>>, vector<4x241xf32>,
    %34 = vector.extract_strided_slice %27 {offsets = [0, 0], sizes = [4, 255], strides = [1, 1]} : vector<4x256xf32> to vector<4x255xf32>
    %c24 = arith.constant 24 : index
    %c1 = arith.constant 1 : index
    %35 = vector.load %arg4[%c24, %c1] : memref<72x256xf32, #tpu.memory_space<vmem>>, vector<4x255xf32>
    tpu.vector_store %arg4[%c24, %c1], %34 {strides = array<i32>} : memref<72x256xf32, #tpu.memory_space<vmem>>, vector<4x255xf32>,
    %c32 = arith.constant 32 : index
    %c0_11 = arith.constant 0 : index
    %36 = vector.load %arg4[%c32, %c0_11] : memref<72x256xf32, #tpu.memory_space<vmem>>, vector<4x256xf32>
    tpu.vector_store %arg4[%c32, %c0_11], %3 {strides = array<i32>} : memref<72x256xf32, #tpu.memory_space<vmem>>, vector<4x256xf32>,
    %37 = vector.extract_strided_slice %24 {offsets = [0, 1], sizes = [4, 255], strides = [1, 1]} : vector<4x256xf32> to vector<4x255xf32>
    %c40 = arith.constant 40 : index
    %c0_12 = arith.constant 0 : index
    %38 = vector.load %arg4[%c40, %c0_12] : memref<72x256xf32, #tpu.memory_space<vmem>>, vector<4x255xf32>
    tpu.vector_store %arg4[%c40, %c0_12], %37 {strides = array<i32>} : memref<72x256xf32, #tpu.memory_space<vmem>>, vector<4x255xf32>,
    %39 = vector.extract_strided_slice %27 {offsets = [0, 15], sizes = [4, 241], strides = [1, 1]} : vector<4x256xf32> to vector<4x241xf32>
    %c48 = arith.constant 48 : index
    %c0_13 = arith.constant 0 : index
    %40 = vector.load %arg4[%c48, %c0_13] : memref<72x256xf32, #tpu.memory_space<vmem>>, vector<4x241xf32>
    tpu.vector_store %arg4[%c48, %c0_13], %39 {strides = array<i32>} : memref<72x256xf32, #tpu.memory_space<vmem>>, vector<4x241xf32>,
    %41 = vector.extract_strided_slice %3 {offsets = [0, 16], sizes = [4, 240], strides = [1, 1]} : vector<4x256xf32> to vector<4x240xf32>
    %c56 = arith.constant 56 : index
    %c0_14 = arith.constant 0 : index
    %42 = vector.load %arg4[%c56, %c0_14] : memref<72x256xf32, #tpu.memory_space<vmem>>, vector<4x240xf32>
    tpu.vector_store %arg4[%c56, %c0_14], %41 {strides = array<i32>} : memref<72x256xf32, #tpu.memory_space<vmem>>, vector<4x240xf32>,
    %43 = vector.extract_strided_slice %24 {offsets = [0, 17], sizes = [4, 239], strides = [1, 1]} : vector<4x256xf32> to vector<4x239xf32>
    %c64 = arith.constant 64 : index
    %c0_15 = arith.constant 0 : index
    %44 = vector.load %arg4[%c64, %c0_15] : memref<72x256xf32, #tpu.memory_space<vmem>>, vector<4x239xf32>
    tpu.vector_store %arg4[%c64, %c0_15], %43 {strides = array<i32>} : memref<72x256xf32, #tpu.memory_space<vmem>>, vector<4x239xf32>,
    %c0_16 = arith.constant 0 : index
    %c0_17 = arith.constant 0 : index
    %45 = vector.load %arg2[%c0_16, %c0_17] : memref<8x72xf32, #tpu.memory_space<vmem>>, vector<8x72xf32>
    %c0_18 = arith.constant 0 : index
    %c0_19 = arith.constant 0 : index
    %46 = vector.load %arg4[%c0_18, %c0_19] : memref<72x256xf32, #tpu.memory_space<vmem>>, vector<72x256xf32>
    %cst_20 = arith.constant dense<0.000000e+00> : vector<8x256xf32>
    %47 = tpu.matmul %45, %46, %cst_20 {dimension_numbers = #tpu.dot_dimension_numbers<[1], [0], [0], [1], [0, 0, 1, 1], [], []>} : vector<8x72xf32>, vector<72x256xf32>, vector<8x256xf32> -> vector<8x256xf32>
    %cst_21 = arith.constant dense<0.000000e+00> : vector<8xf32>
    %48 = vector.multi_reduction <add>, %47, %cst_21 [1] : vector<8x256xf32> to vector<8xf32>
    %49 = vector.shape_cast %48 : vector<8xf32> to vector<8x1xf32>
    %cst_22 = arith.constant 2.560000e+02 : f32
    %50 = vector.broadcast %cst_22 : f32 to vector<8x1xf32>
    %51 = arith.divf %49, %50 : vector<8x1xf32>
    %52 = vector.broadcast %51 : vector<8x1xf32> to vector<8x256xf32>
    %53 = arith.subf %47, %52 : vector<8x256xf32>
    %54 = arith.mulf %53, %53 : vector<8x256xf32>
    %cst_23 = arith.constant dense<0.000000e+00> : vector<8xf32>
    %55 = vector.multi_reduction <add>, %54, %cst_23 [1] : vector<8x256xf32> to vector<8xf32>
    %56 = vector.shape_cast %55 : vector<8xf32> to vector<8x1xf32>
    %cst_24 = arith.constant 2.560000e+02 : f32
    %57 = vector.broadcast %cst_24 : f32 to vector<8x1xf32>
    %58 = arith.divf %56, %57 : vector<8x1xf32>
    %cst_25 = arith.constant 9.99999974E-6 : f32
    %59 = vector.broadcast %cst_25 : f32 to vector<8x1xf32>
    %60 = arith.addf %58, %59 : vector<8x1xf32>
    %61 = math.rsqrt %60 : vector<8x1xf32>
    %62 = vector.broadcast %61 : vector<8x1xf32> to vector<8x256xf32>
    %63 = arith.mulf %53, %62 : vector<8x256xf32>
    %cst_26 = arith.constant 0.000000e+00 : f32
    %64 = vector.broadcast %cst_26 : f32 to vector<8x256xf32>
    %65 = arith.maximumf %63, %64 : vector<8x256xf32>
    %c0_27 = arith.constant 0 : index
    %c0_28 = arith.constant 0 : index
    %c0_29 = arith.constant 0 : index
    %66 = vector.load %arg3[%c0_27, %c0_28, %c0_29] : memref<1x8x256xf32, #tpu.memory_space<vmem>>, vector<1x8x256xf32>
    %67 = vector.shape_cast %66 : vector<1x8x256xf32> to vector<8x256xf32>
    %68 = vector.shape_cast %65 : vector<8x256xf32> to vector<1x8x256xf32>
    tpu.vector_store %arg3[%c0_27, %c0_28, %c0_29], %68 {strides = array<i32>} : memref<1x8x256xf32, #tpu.memory_space<vmem>>, vector<1x8x256xf32>,
    return
  }
  func.func @transform_0(%arg0: i32) -> (i32, i32, i32) {
    %c0_i32 = arith.constant 0 : i32
    %c0_i32_0 = arith.constant 0 : i32
    %c0_i32_1 = arith.constant 0 : i32
    return %arg0, %c0_i32, %c0_i32_0 : i32, i32, i32
  }
  func.func @transform_1(%arg0: i32) -> (i32, i32) {
    %c0_i32 = arith.constant 0 : i32
    %c0_i32_0 = arith.constant 0 : i32
    %c0_i32_1 = arith.constant 0 : i32
    return %c0_i32, %c0_i32_0 : i32, i32
  }
  func.func @transform_2(%arg0: i32) -> (i32, i32, i32) {
    %c0_i32 = arith.constant 0 : i32
    %c0_i32_0 = arith.constant 0 : i32
    %c0_i32_1 = arith.constant 0 : i32
    return %arg0, %c0_i32, %c0_i32_0 : i32, i32, i32
  }
}

</mosaic_0001>

<llo_original>
// kernel: concat_bottleneck_forward.1
$region0: #{concat_bottleneck_forward.1}
  #allocation0 [shape = 'u32[]', space=smem, size = 0x4, offset = 0x4, fixed_abs, tag = 'smem constant byte address 0x4 - core index']
  #allocation1 [shape = 'u32[72,128]{1,0:T(1,128)}', space=vmem, size = 0x9000, scoped, tag = 'internal scratch']
  #allocation2 [shape = 'f32[72,256]{1,0:T(8,128)}', space=vmem, size = 0x12000, scoped, tag = 'scratch operand']
  %s0 = inlined_call_operand.vmem [shape: f32[2,4,256], index: 0, kind: input, shape index: {}]
  %s1 = inlined_call_operand.vmem [shape: f32[8,72], index: 1, kind: input, shape index: {}]
  %s2 = inlined_call_operand.vmem [shape: f32[2,8,256], index: 2, kind: output, shape index: {}]
  %s3 = sld [smem:[#allocation0]]
  $region41: #{concat_bottleneck_forward.1} parent=0
    _
  %s5 = ssub.s32 1, %s3
  %s6 = scalar_select 0, %s5, %s3
  loop: start=0, step=1, limit=4
  $region2: #{concat_bottleneck_forward.1} parent=0 // loop_pre_header
    _
  $region3: #{concat_bottleneck_forward.1} parent=0 // loop_header
    %s8 = sphi 0, %s12
    %p9 = scmp.ge.s32.totalorder %s8, 4
    %s18 = sphi 0, %s20
    %s21 = sphi 0, %s18
    %s22 = sphi 0, %s21
    %s38 = sphi 0, %s22
    %s42 = sphi 0, %s42
    %s44 = sphi 0, %s42
    %s45 = sphi 0, %s44
    %s59 = sphi 0, %s45
    %s65 = sphi 0, %s67
    %s68 = sphi 0, %s65
    %s69 = sphi 0, %s68
    %s85 = sphi 0, %s69
  $region4: #{concat_bottleneck_forward.1} parent=0 // loop_header_branch
    %11 = sbr.rel (%p9) target = $region8
  $region5: #{concat_bottleneck_forward.1} parent=0 // loop_body
    %s13 = ssub.s32 %s8, 1
    %s14 = ssub.s32 %s8, 2
    %s15 = sadd.s32 %s8, 1
    %s16 = ssub.s32 %s8, %s15
    %p17 = scmp.eq.s32.totalorder %s16, 0
    %s19 = sadd.s32 %s18, 1
    %s20 = scalar_select %p17, %s18, %s19
    %p23 = pneg %p17
    %p24 = scmp.eq.s32.totalorder %s8, 1
    %p25 = por %p23, %p24
    %p26 = scmp.ne.s32.totalorder %s18, %s21
    %p27 = scmp.eq.s32.totalorder %s8, 0
    %p28 = por %p26, %p27
    %p29 = scmp.ne.s32.totalorder %s18, %s21
    %p30 = scmp.eq.s32.totalorder %s13, 1
    %p31 = por %p29, %p30
    %p32 = scmp.ne.s32.totalorder %s21, %s22
    %p33 = scmp.eq.s32.totalorder %s13, 0
    %p34 = por %p32, %p33
    %p35 = scmp.ne.s32.totalorder %s21, %s22
    %p36 = scmp.eq.s32.totalorder %s14, 1
    %p37 = por %p35, %p36
    %p39 = scmp.ne.s32.totalorder %s22, %s38
    %p40 = scmp.eq.s32.totalorder %s14, 0
    %p41 = por %p39, %p40
    %s43 = sadd.s32 %s42, 1
    %p46 = scmp.eq.s32.totalorder %s8, 1
    %p47 = scmp.ne.s32.totalorder %s42, %s44
    %p48 = scmp.eq.s32.totalorder %s8, 0
    %p49 = por %p47, %p48
    %p50 = scmp.ne.s32.totalorder %s42, %s44
    %p51 = scmp.eq.s32.totalorder %s13, 1
    %p52 = por %p50, %p51
    %p53 = scmp.ne.s32.totalorder %s44, %s45
    %p54 = scmp.eq.s32.totalorder %s13, 0
    %p55 = por %p53, %p54
    %p56 = scmp.ne.s32.totalorder %s44, %s45
    %p57 = scmp.eq.s32.totalorder %s14, 1
    %p58 = por %p56, %p57
    %p60 = scmp.ne.s32.totalorder %s45, %s59
    %p61 = scmp.eq.s32.totalorder %s14, 0
    %p62 = por %p60, %p61
    %s63 = ssub.s32 %s8, %s15
    %p64 = scmp.eq.s32.totalorder %s63, 0
    %s66 = sadd.s32 %s65, 1
    %s67 = scalar_select %p64, %s65, %s66
    %p70 = pneg %p64
    %p71 = scmp.eq.s32.totalorder %s8, 1
    %p72 = por %p70, %p71
    %p73 = scmp.ne.s32.totalorder %s65, %s68
    %p74 = scmp.eq.s32.totalorder %s8, 0
    %p75 = por %p73, %p74
    %p76 = scmp.ne.s32.totalorder %s65, %s68
    %p77 = scmp.eq.s32.totalorder %s13, 1
    %p78 = por %p76, %p77
    %p79 = scmp.ne.s32.totalorder %s68, %s69
    %p80 = scmp.eq.s32.totalorder %s13, 0
    %p81 = por %p79, %p80
    %p82 = scmp.ne.s32.totalorder %s68, %s69
    %p83 = scmp.eq.s32.totalorder %s14, 1
    %p84 = por %p82, %p83
    %p86 = scmp.ne.s32.totalorder %s69, %s85
    %p87 = scmp.eq.s32.totalorder %s14, 0
    %p88 = por %p86, %p87
    %p89 = scmp.le.s32.totalorder 1, %s8
    %p90 = scmp.lt.s32.totalorder %s8, 3
    %p91 = pnand %p89, %p90
    %p92 = pneg %p91
    // Predicated region
    $region9: #{concat_bottleneck_forward.1} parent=5 // pred_check
      _
    $region10: #{concat_bottleneck_forward.1} parent=5 // pred_check_branch
      %94 = sbr.rel (%p91) target = $region12
    $region11: #{concat_bottleneck_forward.1} parent=5 // pred_region
      %s95 = ssub.s32 %s8, 1
      // Predicated region
      $region13: #{concat_bottleneck_forward.1} parent=11 // pred_check
        %p96 = pneg %p55
      $region14: #{concat_bottleneck_forward.1} parent=11 // pred_check_branch
        %98 = sbr.rel (%p96) target = $region16
      $region15: #{concat_bottleneck_forward.1} parent=11 // pred_region
        _
      $region16: #{concat_bottleneck_forward.1} parent=11 // pred_fallthru
        _
    $region12: #{concat_bottleneck_forward.1} parent=5 // pred_fallthru
      _
    %p99 = scmp.lt.s32.totalorder %s8, 2
    // Predicated region
    $region17: #{concat_bottleneck_forward.1} parent=5 // pred_check
      %p100 = pneg %p99
    $region18: #{concat_bottleneck_forward.1} parent=5 // pred_check_branch
      %102 = sbr.rel (%p100) target = $region20
    $region19: #{concat_bottleneck_forward.1} parent=5 // pred_region
      // Predicated region
      $region21: #{concat_bottleneck_forward.1} parent=19 // pred_check
        %p103 = pneg %p28
      $region22: #{concat_bottleneck_forward.1} parent=19 // pred_check_branch
        %105 = sbr.rel (%p103) target = $region24
      $region23: #{concat_bottleneck_forward.1} parent=19 // pred_region
        %p106 = scmp.lt.s32.totalorder %s8, 1
        %s107 = scalar_select %p106, %s8, 1
        %s108 = smul.addr %s107, 2
        %s109 = smul.addr %s108, 4
        %s110 = scalar_lea.vmem %s0, %s109
      $region24: #{concat_bottleneck_forward.1} parent=19 // pred_fallthru
        _
    $region20: #{concat_bottleneck_forward.1} parent=5 // pred_fallthru
      _
    %p111 = scmp.le.s32.totalorder 1, %s8
    %p112 = scmp.lt.s32.totalorder %s8, 3
    %p113 = pnand %p111, %p112
    %p114 = pneg %p113
    // Predicated region
    $region25: #{concat_bottleneck_forward.1} parent=5 // pred_check
      _
    $region26: #{concat_bottleneck_forward.1} parent=5 // pred_check_branch
      %116 = sbr.rel (%p113) target = $region28
    $region27: #{concat_bottleneck_forward.1} parent=5 // pred_region
      %s117 = ssub.s32 %s8, 1
      %p118 = scmp.lt.s32.totalorder %s13, 1
      %s119 = scalar_select %p118, %s13, 1
      %s120 = smul.addr %s119, 2
      %s121 = smul.addr %s120, 4
      %s122 = scalar_lea.vmem %s0, %s121
      %p123 = pneg %p34
      %p124 = pneg %p31
      %p125 = pneg %p55
      %p126 = pneg %p52
      %p127 = pneg %p81
      %p128 = pneg %p78
      %p129 = scmp.lt.s32.totalorder %s13, 1
      %s130 = scalar_select %p129, %s13, 1
      %s131 = smul.addr %s130, 2
      %s132 = smul.addr %s131, 8
      %s133 = scalar_lea.vmem %s2, %s132
      %p134 = scmp.lt.s32.totalorder %s13, 1
      %s135 = scalar_select %p134, %s13, 1
      %s136 = smul.addr %s135, 2
      %s137 = smul.addr %s136, 4
      %s138 = scalar_lea.vmem %s0, %s137
      %p139 = scmp.lt.s32.totalorder %s13, 1
      %s140 = scalar_select %p139, %s13, 1
      %s141 = smul.addr %s140, 2
      %s142 = smul.addr %s141, 8
      %s143 = scalar_lea.vmem %s2, %s142
      %144 = vst [vmem:[#allocation2] sm:$0xff] 0.0
      %145 = vst [vmem:[#allocation2 + $0x8] sm:$0xff] 0.0
      %146 = vst [vmem:[#allocation2 + $0x10] sm:$0xff] 0.0
      %147 = vst [vmem:[#allocation2 + $0x18] sm:$0xff] 0.0
      %148 = vst [vmem:[#allocation2 + $0x20] sm:$0xff] 0.0
      %149 = vst [vmem:[#allocation2 + $0x28] sm:$0xff] 0.0
      %150 = vst [vmem:[#allocation2 + $0x30] sm:$0xff] 0.0
      %151 = vst [vmem:[#allocation2 + $0x38] sm:$0xff] 0.0
      %152 = vst [vmem:[#allocation2 + $0x40] sm:$0xff] 0.0
      %153 = vst [vmem:[#allocation2 + $0x48] sm:$0xff] 0.0
      %154 = vst [vmem:[#allocation2 + $0x50] sm:$0xff] 0.0
      %155 = vst [vmem:[#allocation2 + $0x58] sm:$0xff] 0.0
      %156 = vst [vmem:[#allocation2 + $0x60] sm:$0xff] 0.0
      %157 = vst [vmem:[#allocation2 + $0x68] sm:$0xff] 0.0
      %158 = vst [vmem:[#allocation2 + $0x70] sm:$0xff] 0.0
      %159 = vst [vmem:[#allocation2 + $0x78] sm:$0xff] 0.0
      %160 = vst [vmem:[#allocation2 + $0x80] sm:$0xff] 0.0
      %161 = vst [vmem:[#allocation2 + $0x88] sm:$0xff] 0.0
      %v162 = vld [vmem:[%s138] sm:$0xff]
      %v163 = vlaneseq
      %v164 = vand.u32 %v163, 127
      %v165 = vadd.s32 %v164, 128
      %vm166 = vcmp.lt.s32.totalorder %v164, 0
      %v167 = vsub.s32 0, %v164
      %v168 = vsel %vm166, %v167, %v164
      %v169 = vshrl.u32 %v168, 4
      %v170 = vand.u32 %v168, 15
      %v171 = vsub.s32 0, %v170
      %v172 = vsel %vm166, %v171, %v170
      %vm173 = vcmp.lt.s32.totalorder %v165, 0
      %v174 = vsub.s32 0, %v165
      %v175 = vsel %vm173, %v174, %v165
      %v176 = vshrl.u32 %v175, 4
      %v177 = vand.u32 %v175, 15
      %v178 = vsub.s32 0, %v177
      %v179 = vsel %vm173, %v178, %v177
      %vm180 = vcmp.ne.s32.totalorder %v172, 0
      %vm181 = vcmp.ne.s32.totalorder %v179, 0
      %vm182 = vcmp.lt.s32.totalorder %v172, 0
      %vm183 = vcmp.lt.s32.totalorder %v179, 0
      %vm184 = vmand %vm182, %vm180
      %vm185 = vmand %vm183, %vm181
      %v186 = vadd.s32 %v172, 16
      %v187 = vadd.s32 %v179, 16
      %v188 = vsel %vm184, %v186, %v172
      %v189 = vsel %vm185, %v187, %v179
      %vm190 = vcmp.ge.s32.totalorder %v188, 1
      %vm191 = vcmp.ge.s32.totalorder %v189, 1
      %193 = vst [vmem:[#allocation1] ss:$2 sm:$0xff] %v162
      %v194 = vld.sshfl [vmem:[#allocation1] sm:$0xff pattern:$0x75316420]
      %v195 = vld.sshfl [vmem:[#allocation1 + $0x8] sm:$0xff pattern:$0x75316420]
      %v198 = vsel %vm190, %v194, 0.0
      %v199 = vsel %vm191, %v195, 0.0
      %vm200 = vcmp.le.s32.totalorder %v188, 14
      %vm201 = vcmp.le.s32.totalorder %v189, 14
      %202 = vst [vmem:[#allocation1] ss:$2 sm:$0xff] %v162
      %v203 = vld.sshfl [vmem:[#allocation1] sm:$0xff pattern:$0x75316420]
      %v204 = vld.sshfl [vmem:[#allocation1 + $0x8] sm:$0xff pattern:$0x75316420]
      %v207 = vsel %vm200, %v203, 0.0
      %v208 = vsel %vm201, %v204, 0.0
      %211 = vrot.lane.b32.xlu0 %v207, 17
      %v212 = vpop.permute.xlu0 %211
      %213 = vrot.lane.b32.xlu0 %v208, 17
      %v214 = vpop.permute.xlu0 %213
      %vm215 = vcmask 138240
      %v216 = vsel %vm215, %v212, %v214
      %vm219 = vcmask 1043592
      %220 = vst.msk [vmem:[#allocation2] sm:$0xf] %vm219, %v212
      %221 = vst [vmem:[#allocation2 + $0x8] sm:$0xf] %v216
      %222 = vst [vmem:[#allocation1] ss:$2 sm:$0xff] %v162
      %v223 = vld.sshfl [vmem:[#allocation1] sm:$0xff pattern:$0x75316420]
      %v224 = vld.sshfl [vmem:[#allocation1 + $0x8] sm:$0xff pattern:$0x75316420]
      %225 = vrot.lane.b32.xlu0 %v223, 16
      %v226 = vpop.permute.xlu0 %225
      %227 = vrot.lane.b32.xlu0 %v224, 16
      %v228 = vpop.permute.xlu0 %227
      %vm229 = vcmask 130048
      %v230 = vsel %vm229, %v226, %v228
      %vm233 = vcmask 1043584
      %234 = vst.msk [vmem:[#allocation2 + $0x10] sm:$0xf] %vm233, %v226
      %235 = vst [vmem:[#allocation2 + $0x18] sm:$0xf] %v230
      %238 = vrot.lane.b32.xlu0 %v198, 15
      %v239 = vpop.permute.xlu0 %238
      %240 = vrot.lane.b32.xlu0 %v199, 15
      %v241 = vpop.permute.xlu0 %240
      %vm242 = vcmask 121856
      %v243 = vsel %vm242, %v239, %v241
      %vm246 = vcmask 1043576
      %247 = vst.msk [vmem:[#allocation2 + $0x20] sm:$0xf] %vm246, %v239
      %248 = vst [vmem:[#allocation2 + $0x28] sm:$0xf] %v243
      %249 = vrot.lane.b32.xlu0 %v207, 1
      %v250 = vpop.permute.xlu0 %249
      %251 = vrot.lane.b32.xlu0 %v208, 1
      %v252 = vpop.permute.xlu0 %251
      %vm253 = vcmask 7168
      %v254 = vsel %vm253, %v250, %v252
      %vm257 = vcmask 1043464
      %258 = vst.msk [vmem:[#allocation2 + $0x30] sm:$0xf] %vm257, %v250
      %259 = vst [vmem:[#allocation2 + $0x38] sm:$0xf] %v254
      %260 = vst [vmem:[#allocation1] ss:$2 sm:$0xff] %v162
      %v261 = vld.sshfl [vmem:[#allocation1] sm:$0xff pattern:$0x75316420]
      %v262 = vld.sshfl [vmem:[#allocation1 + $0x8] sm:$0xff pattern:$0x75316420]
      %265 = vst [vmem:[#allocation2 + $0x40] sm:$0xf] %v261
      %266 = vst [vmem:[#allocation2 + $0x48] sm:$0xf] %v262
      %267 = vrot.lane.b32.xlu0 %v198, 127
      %v268 = vpop.permute.xlu0 %267
      %269 = vrot.lane.b32.xlu0 %v199, 127
      %v270 = vpop.permute.xlu0 %269
      %vm271 = vcmask 1039360
      %v272 = vsel %vm271, %v268, %v270
      %275 = vst [vmem:[#allocation2 + $0x50] sm:$0xf] %v272
      %vm276 = vcmask 1035264
      %277 = vst.msk [vmem:[#allocation2 + $0x58] sm:$0xf] %vm276, %v270
      %278 = vrot.lane.b32.xlu0 %v207, 113
      %v279 = vpop.permute.xlu0 %278
      %280 = vrot.lane.b32.xlu0 %v208, 113
      %v281 = vpop.permute.xlu0 %280
      %vm282 = vcmask 924672
      %v283 = vsel %vm282, %v279, %v281
      %286 = vst [vmem:[#allocation2 + $0x60] sm:$0xf] %v283
      %vm287 = vcmask 920576
      %288 = vst.msk [vmem:[#allocation2 + $0x68] sm:$0xf] %vm287, %v281
      %289 = vst [vmem:[#allocation1] ss:$2 sm:$0xff] %v162
      %v290 = vld.sshfl [vmem:[#allocation1] sm:$0xff pattern:$0x75316420]
      %v291 = vld.sshfl [vmem:[#allocation1 + $0x8] sm:$0xff pattern:$0x75316420]
      %292 = vrot.lane.b32.xlu0 %v290, 112
      %v293 = vpop.permute.xlu0 %292
      %294 = vrot.lane.b32.xlu0 %v291, 112
      %v295 = vpop.permute.xlu0 %294
      %vm296 = vcmask 916480
      %v297 = vsel %vm296, %v293, %v295
      %300 = vst [vmem:[#allocation2 + $0x70] sm:$0xf] %v297
      %vm301 = vcmask 912384
      %302 = vst.msk [vmem:[#allocation2 + $0x78] sm:$0xf] %vm301, %v295
      %303 = vrot.lane.b32.xlu0 %v198, 111
      %v304 = vpop.permute.xlu0 %303
      %305 = vrot.lane.b32.xlu0 %v199, 111
      %v306 = vpop.permute.xlu0 %305
      %vm307 = vcmask 908288
      %v308 = vsel %vm307, %v304, %v306
      %311 = vst [vmem:[#allocation2 + $0x80] sm:$0xf] %v308
      %vm312 = vcmask 904192
      %313 = vst.msk [vmem:[#allocation2 + $0x88] sm:$0xf] %vm312, %v306
      %v314 = vld [vmem:[%s1] sm:$0xff]
      %v315 = vld [vmem:[#allocation2] sm:$0xff]
      %v316 = vld [vmem:[#allocation2 + $0x8] sm:$0xff]
      %v317 = vld [vmem:[#allocation2 + $0x10] sm:$0xff]
      %v318 = vld [vmem:[#allocation2 + $0x18] sm:$0xff]
      %v319 = vld [vmem:[#allocation2 + $0x20] sm:$0xff]
      %v320 = vld [vmem:[#allocation2 + $0x28] sm:$0xff]
      %v321 = vld [vmem:[#allocation2 + $0x30] sm:$0xff]
      %v322 = vld [vmem:[#allocation2 + $0x38] sm:$0xff]
      %v323 = vld [vmem:[#allocation2 + $0x40] sm:$0xff]
      %v324 = vld [vmem:[#allocation2 + $0x48] sm:$0xff]
      %v325 = vld [vmem:[#allocation2 + $0x50] sm:$0xff]
      %v326 = vld [vmem:[#allocation2 + $0x58] sm:$0xff]
      %v327 = vld [vmem:[#allocation2 + $0x60] sm:$0xff]
      %v328 = vld [vmem:[#allocation2 + $0x68] sm:$0xff]
      %v329 = vld [vmem:[#allocation2 + $0x70] sm:$0xff]
      %v330 = vld [vmem:[#allocation2 + $0x78] sm:$0xff]
      %v331 = vld [vmem:[#allocation2 + $0x80] sm:$0xff]
      %v332 = vld [vmem:[#allocation2 + $0x88] sm:$0xff]
      %vm333 = vcmask 588800
      %v335 = vsel %vm333, %v314, 0
      %337 = vmatpush.msra.mxu0 0.0
      %338 = vmatpush.msra.mxu0 0.0
      %339 = vmatpush.msra.mxu0 0.0
      %340 = vmatpush.msra.mxu0 0.0
      %341 = vmatpush.msra.mxu0 0.0
      %342 = vmatpush.msra.mxu0 0.0
      %343 = vmatpush.msra.mxu0 0.0
      %344 = vmatpush.msra.mxu0 %v331
      %345 = vmatpush.msra.mxu0 %v329
      %346 = vmatpush.msra.mxu0 %v327
      %347 = vmatpush.msra.mxu0 %v325
      %348 = vmatpush.msra.mxu0 %v323
      %349 = vmatpush.msra.mxu0 %v321
      %350 = vmatpush.msra.mxu0 %v319
      %351 = vmatpush.msra.mxu0 %v317
      %352 = vmatpush.msra.mxu0 %v315
      %353 = vmatmul.f32.gmra.mxu0 %v335
      %v354 = vpop.f32.mrf.mxu0
      %v355 = vadd.f32 0.0, %v354
      %356 = vdwg.mxu0
      %357 = vmatpush.msra.mxu0 0.0
      %358 = vmatpush.msra.mxu0 0.0
      %359 = vmatpush.msra.mxu0 0.0
      %360 = vmatpush.msra.mxu0 0.0
      %361 = vmatpush.msra.mxu0 0.0
      %362 = vmatpush.msra.mxu0 0.0
      %363 = vmatpush.msra.mxu0 0.0
      %364 = vmatpush.msra.mxu0 %v332
      %365 = vmatpush.msra.mxu0 %v330
      %366 = vmatpush.msra.mxu0 %v328
      %367 = vmatpush.msra.mxu0 %v326
      %368 = vmatpush.msra.mxu0 %v324
      %369 = vmatpush.msra.mxu0 %v322
      %370 = vmatpush.msra.mxu0 %v320
      %371 = vmatpush.msra.mxu0 %v318
      %372 = vmatpush.msra.mxu0 %v316
      %373 = vmatmul.f32.gmra.mxu0 %v335
      %v374 = vpop.f32.mrf.mxu0
      %v375 = vadd.f32 0.0, %v374
      %376 = vdwg.mxu0
      %v377 = vadd.f32 %v355, %v375
      %378 = vadd.xlane.f32.xlu0 %v377
      %v379 = vpop.xlane.xlu0 %378
      %v380 = vrcp.pop 256.0
      %v381 = vmul.f32 256.0, %v380
      %v382 = vsub.f32 1.0, %v381
      %v383 = vmul.f32 %v380, %v382
      %v384 = vadd.f32 %v380, %v383
      %vm385 = vweird.f32 %v380
      %v386 = vsel %vm385, %v380, %v384
      %v387 = vmul.f32 %v379, %v386
      %v388 = vsub.f32 %v355, %v387
      %v389 = vsub.f32 %v375, %v387
      %v390 = vmul.f32 %v388, %v388
      %v391 = vmul.f32 %v389, %v389
      %v392 = vadd.f32 %v390, %v391
      %393 = vadd.xlane.f32.xlu0 %v392
      %v394 = vpop.xlane.xlu0 %393
      %v395 = vmul.f32 %v394, %v386
      %v396 = vadd.f32 %v395, 1e-05
      %v397 = vrsqrt.pop %v396
      %v398 = vmul.f32 %v397, %v396
      %v399 = vmul.f32 %v398, %v397
      %v400 = vmul.f32 0.5, %v399
      %v401 = vsub.f32 1.5, %v400
      %v402 = vmul.f32 %v397, %v401
      %vm403 = vweird.f32 %v396
      %vm404 = vweird.f32 %v397
      %vm405 = vmor %vm403, %vm404
      %v406 = vsel %vm405, %v397, %v402
      %v407 = vmul.f32 %v388, %v406
      %v408 = vmul.f32 %v389, %v406
      %v409 = vmax.f32 %v407, 0.0
      %v410 = vmax.f32 %v408, 0.0
      %411 = vst [vmem:[%s143] sm:$0xff] %v409
      %412 = vst [vmem:[%s143 + $0x8] sm:$0xff] %v410
      %p413 = scmp.lt.s32.totalorder %s13, 1
      %s414 = scalar_select %p413, %s13, 1
      %s415 = smul.addr %s414, 2
      %s416 = smul.addr %s415, 8
      %s417 = scalar_lea.vmem %s2, %s416
      // Predicated region
      $region29: #{concat_bottleneck_forward.1} parent=27 // pred_check
        %p418 = pneg %p78
      $region30: #{concat_bottleneck_forward.1} parent=27 // pred_check_branch
        %420 = sbr.rel (%p418) target = $region32
      $region31: #{concat_bottleneck_forward.1} parent=27 // pred_region
        _
      $region32: #{concat_bottleneck_forward.1} parent=27 // pred_fallthru
        _
    $region28: #{concat_bottleneck_forward.1} parent=5 // pred_fallthru
      _
    %p421 = scmp.le.s32.totalorder 2, %s8
    // Predicated region
    $region33: #{concat_bottleneck_forward.1} parent=5 // pred_check
      %p422 = pneg %p421
    $region34: #{concat_bottleneck_forward.1} parent=5 // pred_check_branch
      %424 = sbr.rel (%p422) target = $region36
    $region35: #{concat_bottleneck_forward.1} parent=5 // pred_region
      %s425 = ssub.s32 %s8, 2
      // Predicated region
      $region37: #{concat_bottleneck_forward.1} parent=35 // pred_check
        %p426 = pneg %p84
      $region38: #{concat_bottleneck_forward.1} parent=35 // pred_check_branch
        %428 = sbr.rel (%p426) target = $region40
      $region39: #{concat_bottleneck_forward.1} parent=35 // pred_region
        %p429 = scmp.lt.s32.totalorder %s14, 1
        %s430 = scalar_select %p429, %s14, 1
        %s431 = smul.addr %s430, 2
        %s432 = smul.addr %s431, 8
        %s433 = scalar_lea.vmem %s2, %s432
      $region40: #{concat_bottleneck_forward.1} parent=35 // pred_fallthru
        _
    $region36: #{concat_bottleneck_forward.1} parent=5 // pred_fallthru
      _
  $region6: #{concat_bottleneck_forward.1} parent=0 // loop_footer
    %s12 = sadd.s32 1, %s8
  $region7: #{concat_bottleneck_forward.1} parent=0 // loop_footer_branch
    %7 = sbr.rel target = $region3
  $region8: #{concat_bottleneck_forward.1} parent=0 // loop_exit
    _

</llo_original>
